<compile_context>
chip_gen: v7x
topology: tpu7x:2x2x1
jax: 0.10.0
libtpu: 0.0.40
codegen_flags: <defaults>
</compile_context>

<pallas_src>
import functools

import jax
import jax.numpy as jnp
import numpy as np
from jax.experimental import pallas as pl
from jax.experimental.pallas import tpu as pltpu


# ----------------------------------------------------------------------------
# Pallas kernel (one batch element per grid step)
# ----------------------------------------------------------------------------
def _gconv_kernel(xy_ref, w_ref, out_ref, *, C, H, W, HW):
    """Fused gconv forward for one image in (2C, H*W) layout.

    xy_ref : (1, 2C, HW) f32   rows [0:C]=x, [C:2C]=y
    w_ref  : (24, 12C)  bf16   row = dy*8 + o  (o=0,1: att_p, o=2,3: att_n, 4..7 pad)
                               col = dx*4C + j (j in [0,2C): relu([x;y]),
                                                j in [2C,4C): relu(-[x;y]))
    """
    xy = xy_ref[0]                                   # (2C, HW) f32
    r = jnp.maximum(xy, 0.0)                         # relu([x; y])
    n = jnp.maximum(-xy, 0.0)                        # relu(-[x; y])
    s = jnp.concatenate([r, n], axis=0)              # (4C, HW) f32

    # ---- boundary masks, generated in-kernel (no HBM mask input) ------------
    # Row masks only need linear-index compares; column masks use an exact
    # float floor trick (avoids vector integer div/mod lowering).
    idx = jax.lax.broadcasted_iota(jnp.int32, (1, HW), 1)
    row_t = jnp.where(idx >= W, 1.0, 0.0)            # source row h-1 >= 0
    row_b = jnp.where(idx < HW - W, 1.0, 0.0)        # source row h+1 <= H-1
    pf = idx.astype(jnp.float32)
    colf = pf - W * jnp.floor(pf * (1.0 / W) + 0.5 / W)   # exact column index
    col_l = jnp.where(colf >= 0.5, 1.0, 0.0)         # source col w-1 >= 0
    col_r = jnp.where(colf <= W - 1.5, 1.0, 0.0)     # source col w+1 <= W-1

    # ---- separable 3x3: column (dx) shifts before the MXU -------------------
    s_l = (pltpu.roll(s, shift=1, axis=1) * col_l).astype(jnp.bfloat16)       # in[p-1]
    s_c = s.astype(jnp.bfloat16)                                              # in[p]
    s_r = (pltpu.roll(s, shift=HW - 1, axis=1) * col_r).astype(jnp.bfloat16)  # in[p+1]
    s_stack = jnp.concatenate([s_l, s_c, s_r], axis=0)                        # (12C, HW)

    # ---- one MXU dot: rows [8*dy : 8*dy+8] are the per-dy partial conv ------
    v = jnp.dot(w_ref[...], s_stack, preferred_element_type=jnp.float32)      # (24, HW)

    # ---- row (dy) shifts after the MXU --------------------------------------
    acc = v[8:16, :]                                                   # dy offset  0
    acc = acc + pltpu.roll(v[0:8, :], shift=W, axis=1) * row_t         # dy offset -1
    acc = acc + pltpu.roll(v[16:24, :], shift=HW - W, axis=1) * row_b  # dy offset +1

    # sigmoid = 1/(1+exp(-acc)): exp + approximate reciprocal on the EUP.
    att = pl.reciprocal(1.0 + jnp.exp(-acc), approx=True)   # (8, HW); rows 0..3 used

    ap0 = att[0:1, :]
    ap1 = att[1:2, :]
    an0 = att[2:3, :]
    an1 = att[3:4, :]
    rx = r[0:C, :]
    ry = r[C:2 * C, :]
    nx = n[0:C, :]
    ny = n[C:2 * C, :]
    out_ref[0] = 0.5 * (rx * ap0 + ry * ap1) - 0.5 * (nx * an0 + ny * an1)


# ----------------------------------------------------------------------------
# Host-side packing helper (tiny, trace-time glue)
# ----------------------------------------------------------------------------
def _pack_weights(wp, wn, C):
    """wp, wn: (2, 2C, 3, 3) OIHW  ->  (24, 12C) bf16 separable-layout weights."""
    twoC = 2 * C
    wp_t = jnp.transpose(wp.astype(jnp.float32), (2, 0, 3, 1))   # (dy, o, dx, cin)
    wn_t = jnp.transpose(wn.astype(jnp.float32), (2, 0, 3, 1))
    w = jnp.zeros((3, 8, 3, 4 * C), jnp.float32)
    w = w.at[:, 0:2, :, 0:twoC].set(wp_t)          # att_p rows <- relu([x;y]) channels
    w = w.at[:, 2:4, :, twoC:4 * C].set(wn_t)      # att_n rows <- relu(-[x;y]) channels
    return w.reshape(24, 12 * C).astype(jnp.bfloat16)


# ----------------------------------------------------------------------------
# Wrapper
# ----------------------------------------------------------------------------
def gconv_forward(x_nchw, y_nchw, wp, wn):
    N, C, H, W = x_nchw.shape
    HW = H * W

    # Merge x/y into one (N, 2C, HW) slab: exact 8-sublane tiles for C=4.
    xy = jnp.concatenate([x_nchw, y_nchw], axis=1).reshape(N, 2 * C, HW)
    xy = xy.astype(jnp.float32)
    w_all = _pack_weights(wp, wn, C)

    # Per-generation scoped-VMEM limit (~3/4 of physical, capped).
    vmem_limit = 48 * 1024 * 1024
    try:
        info = pltpu.get_tpu_info()
        vmem_limit = min(int(info.vmem_capacity_bytes) * 3 // 4, 100 * 1024 * 1024)
    except Exception:
        pass

    kernel = functools.partial(_gconv_kernel, C=C, H=H, W=W, HW=HW)
    out = pl.pallas_call(
        kernel,
        out_shape=jax.ShapeDtypeStruct((N, C, HW), jnp.float32),
        grid=(N,),
        in_specs=[pl.BlockSpec((1, 2 * C, HW), lambda b: (b, 0, 0)),
                  pl.BlockSpec((24, 12 * C), lambda b: (0, 0))],
        out_specs=pl.BlockSpec((1, C, HW), lambda b: (b, 0, 0)),
        compiler_params=pltpu.CompilerParams(
            dimension_semantics=("parallel",),
            vmem_limit_bytes=vmem_limit),
    )(xy, w_all)

    return out.reshape(N, C, H, W)


# ----------------------------------------------------------------------------
# Pure-JAX reference (matches the PyTorch module)
# ----------------------------------------------------------------------------
def reference(x, y, wp, wn):
    rx = jnp.maximum(x, 0.0)
    ry = jnp.maximum(y, 0.0)
    nx = jnp.maximum(-x, 0.0)
    ny = jnp.maximum(-y, 0.0)

    def conv3x3(inp, w):  # w: OIHW
        return jax.lax.conv_general_dilated(
            inp, w, window_strides=(1, 1), padding=((1, 1), (1, 1)),
            dimension_numbers=("NCHW", "OIHW", "NCHW"))

    att_p = jax.nn.sigmoid(conv3x3(jnp.concatenate([rx, ry], axis=1), wp))
    att_n = jax.nn.sigmoid(conv3x3(jnp.concatenate([nx, ny], axis=1), wn))
    return ((rx * att_p[:, 0:1] + ry * att_p[:, 1:2]) * 0.5
            - (nx * att_n[:, 0:1] + ny * att_n[:, 1:2]) * 0.5)


# ----------------------------------------------------------------------------
if __name__ == "__main__":
    key = jax.random.PRNGKey(0)
    kx, ky, kp, kn = jax.random.split(key, 4)

    # in_ch1 = 4 (in_ch2 is unused by the forward pass of the module)
    N, C, H, W = 2, 4, 16, 16
    x = jax.random.normal(kx, (N, C, H, W), dtype=jnp.float32)
    y = jax.random.normal(ky, (N, C, H, W), dtype=jnp.float32)
    wp = jax.random.normal(kp, (2, 2 * C, 3, 3), dtype=jnp.float32) * 0.1
    wn = jax.random.normal(kn, (2, 2 * C, 3, 3), dtype=jnp.float32) * 0.1

    out = gconv_forward(x, y, wp, wn)
    out = jax.block_until_ready(out)
    assert out.shape == (N, C, H, W)

    ref = reference(x, y, wp, wn)
    err = float(np.max(np.abs(np.asarray(out) - np.asarray(ref))))
    assert np.allclose(np.asarray(out), np.asarray(ref), rtol=2e-2, atol=2e-2), err

    print("KERNEL_OK")
</pallas_src>

<mosaic_0001>
module attributes {stable_mosaic.version = 11 : i64} {
  func.func @_gconv_kernel(%arg0: i32, %arg1: memref<1x8x256xf32, #tpu.memory_space<vmem>>, %arg2: memref<24x48xbf16, #tpu.memory_space<vmem>>, %arg3: memref<1x4x256xf32, #tpu.memory_space<vmem>>) attributes {dimension_semantics = [#tpu.dimension_semantics<parallel>], iteration_bounds = array<i64: 2>, scalar_prefetch = 0 : i64, scratch_operands = 0 : i64, tpu.core_type = #tpu.core_type<tc>, window_params = [{transform_indices = @transform_0, window_bounds = array<i64: 1, 8, 256>}, {pipeline_mode = #tpu.pipeline_mode<synchronous>, transform_indices = @transform_1, window_bounds = array<i64: 24, 48>}, {transform_indices = @transform_2, window_bounds = array<i64: 1, 4, 256>}]} {
    %c0 = arith.constant 0 : index
    %c0_0 = arith.constant 0 : index
    %c0_1 = arith.constant 0 : index
    %0 = vector.load %arg1[%c0, %c0_0, %c0_1] : memref<1x8x256xf32, #tpu.memory_space<vmem>>, vector<1x8x256xf32>
    %1 = vector.shape_cast %0 : vector<1x8x256xf32> to vector<8x256xf32>
    %cst = arith.constant 0.000000e+00 : f32
    %2 = vector.broadcast %cst : f32 to vector<8x256xf32>
    %3 = arith.maximumf %1, %2 : vector<8x256xf32>
    %cst_2 = arith.constant 0.000000e+00 : f32
    %4 = vector.broadcast %cst_2 : f32 to vector<8x256xf32>
    %5 = arith.subf %4, %1 : vector<8x256xf32>
    %cst_3 = arith.constant 0.000000e+00 : f32
    %6 = vector.broadcast %cst_3 : f32 to vector<8x256xf32>
    %7 = arith.maximumf %5, %6 : vector<8x256xf32>
    %8 = tpu.concatenate %3, %7 in 0 : vector<8x256xf32>, vector<8x256xf32> -> vector<16x256xf32>
    %9 = tpu.iota {dimensions = array<i32: 1>} : vector<1x256xi32>
    %c16_i32 = arith.constant 16 : i32
    %10 = vector.broadcast %c16_i32 : i32 to vector<1x256xi32>
    %11 = arith.cmpi sge, %9, %10 : vector<1x256xi32>
    %cst_4 = arith.constant 1.000000e+00 : f32
    %cst_5 = arith.constant 0.000000e+00 : f32
    %12 = vector.broadcast %cst_4 : f32 to vector<1x256xf32>
    %13 = vector.broadcast %cst_5 : f32 to vector<1x256xf32>
    %14 = arith.select %11, %12, %13 : vector<1x256xi1>, vector<1x256xf32>
    %c240_i32 = arith.constant 240 : i32
    %15 = vector.broadcast %c240_i32 : i32 to vector<1x256xi32>
    %16 = arith.cmpi slt, %9, %15 : vector<1x256xi32>
    %cst_6 = arith.constant 1.000000e+00 : f32
    %cst_7 = arith.constant 0.000000e+00 : f32
    %17 = vector.broadcast %cst_6 : f32 to vector<1x256xf32>
    %18 = vector.broadcast %cst_7 : f32 to vector<1x256xf32>
    %19 = arith.select %16, %17, %18 : vector<1x256xi1>, vector<1x256xf32>
    %20 = arith.sitofp %9 : vector<1x256xi32> to vector<1x256xf32>
    %cst_8 = arith.constant 6.250000e-02 : f32
    %21 = vector.broadcast %cst_8 : f32 to vector<1x256xf32>
    %22 = arith.mulf %20, %21 : vector<1x256xf32>
    %cst_9 = arith.constant 3.125000e-02 : f32
    %23 = vector.broadcast %cst_9 : f32 to vector<1x256xf32>
    %24 = arith.addf %22, %23 : vector<1x256xf32>
    %25 = math.floor %24 : vector<1x256xf32>
    %cst_10 = arith.constant 1.600000e+01 : f32
    %26 = vector.broadcast %cst_10 : f32 to vector<1x256xf32>
    %27 = arith.mulf %26, %25 : vector<1x256xf32>
    %28 = arith.subf %20, %27 : vector<1x256xf32>
    %cst_11 = arith.constant 5.000000e-01 : f32
    %29 = vector.broadcast %cst_11 : f32 to vector<1x256xf32>
    %30 = arith.cmpf oge, %28, %29 : vector<1x256xf32>
    %cst_12 = arith.constant 1.000000e+00 : f32
    %cst_13 = arith.constant 0.000000e+00 : f32
    %31 = vector.broadcast %cst_12 : f32 to vector<1x256xf32>
    %32 = vector.broadcast %cst_13 : f32 to vector<1x256xf32>
    %33 = arith.select %30, %31, %32 : vector<1x256xi1>, vector<1x256xf32>
    %cst_14 = arith.constant 1.450000e+01 : f32
    %34 = vector.broadcast %cst_14 : f32 to vector<1x256xf32>
    %35 = arith.cmpf ole, %28, %34 : vector<1x256xf32>
    %cst_15 = arith.constant 1.000000e+00 : f32
    %cst_16 = arith.constant 0.000000e+00 : f32
    %36 = vector.broadcast %cst_15 : f32 to vector<1x256xf32>
    %37 = vector.broadcast %cst_16 : f32 to vector<1x256xf32>
    %38 = arith.select %35, %36, %37 : vector<1x256xi1>, vector<1x256xf32>
    %c1_i32 = arith.constant 1 : i32
    %39 = tpu.dynamic_rotate %8 by %c1_i32 dim 1 : vector<16x256xf32>, i32 -> vector<16x256xf32>
    %40 = vector.broadcast %33 : vector<1x256xf32> to vector<16x256xf32>
    %41 = arith.mulf %39, %40 : vector<16x256xf32>
    %42 = arith.truncf %41 : vector<16x256xf32> to vector<16x256xbf16>
    %43 = arith.truncf %8 : vector<16x256xf32> to vector<16x256xbf16>
    %c255_i32 = arith.constant 255 : i32
    %44 = tpu.dynamic_rotate %8 by %c255_i32 dim 1 : vector<16x256xf32>, i32 -> vector<16x256xf32>
    %45 = vector.broadcast %38 : vector<1x256xf32> to vector<16x256xf32>
    %46 = arith.mulf %44, %45 : vector<16x256xf32>
    %47 = arith.truncf %46 : vector<16x256xf32> to vector<16x256xbf16>
    %48 = tpu.concatenate %42, %43, %47 in 0 : vector<16x256xbf16>, vector<16x256xbf16>, vector<16x256xbf16> -> vector<48x256xbf16>
    %c0_17 = arith.constant 0 : index
    %c0_18 = arith.constant 0 : index
    %49 = vector.load %arg2[%c0_17, %c0_18] : memref<24x48xbf16, #tpu.memory_space<vmem>>, vector<24x48xbf16>
    %cst_19 = arith.constant dense<0.000000e+00> : vector<24x256xf32>
    %50 = tpu.matmul %49, %48, %cst_19 {dimension_numbers = #tpu.dot_dimension_numbers<[1], [0], [0], [1], [0, 0, 1, 1], [], []>} : vector<24x48xbf16>, vector<48x256xbf16>, vector<24x256xf32> -> vector<24x256xf32>
    %51 = vector.extract_strided_slice %50 {offsets = [8, 0], sizes = [8, 256], strides = [1, 1]} : vector<24x256xf32> to vector<8x256xf32>
    %52 = vector.extract_strided_slice %50 {offsets = [0, 0], sizes = [8, 256], strides = [1, 1]} : vector<24x256xf32> to vector<8x256xf32>
    %c16_i32_20 = arith.constant 16 : i32
    %53 = tpu.dynamic_rotate %52 by %c16_i32_20 dim 1 : vector<8x256xf32>, i32 -> vector<8x256xf32>
    %54 = vector.broadcast %14 : vector<1x256xf32> to vector<8x256xf32>
    %55 = arith.mulf %53, %54 : vector<8x256xf32>
    %56 = arith.addf %51, %55 : vector<8x256xf32>
    %57 = vector.extract_strided_slice %50 {offsets = [16, 0], sizes = [8, 256], strides = [1, 1]} : vector<24x256xf32> to vector<8x256xf32>
    %c240_i32_21 = arith.constant 240 : i32
    %58 = tpu.dynamic_rotate %57 by %c240_i32_21 dim 1 : vector<8x256xf32>, i32 -> vector<8x256xf32>
    %59 = vector.broadcast %19 : vector<1x256xf32> to vector<8x256xf32>
    %60 = arith.mulf %58, %59 : vector<8x256xf32>
    %61 = arith.addf %56, %60 : vector<8x256xf32>
    %cst_22 = arith.constant 0.000000e+00 : f32
    %62 = vector.broadcast %cst_22 : f32 to vector<8x256xf32>
    %63 = arith.subf %62, %61 : vector<8x256xf32>
    %64 = math.exp %63 : vector<8x256xf32>
    %cst_23 = arith.constant 1.000000e+00 : f32
    %65 = vector.broadcast %cst_23 : f32 to vector<8x256xf32>
    %66 = arith.addf %65, %64 : vector<8x256xf32>
    %67 = tpu.reciprocal %66 {approx = true} : vector<8x256xf32> -> vector<8x256xf32>
    %68 = vector.extract_strided_slice %67 {offsets = [0, 0], sizes = [1, 256], strides = [1, 1]} : vector<8x256xf32> to vector<1x256xf32>
    %69 = vector.extract_strided_slice %67 {offsets = [1, 0], sizes = [1, 256], strides = [1, 1]} : vector<8x256xf32> to vector<1x256xf32>
    %70 = vector.extract_strided_slice %67 {offsets = [2, 0], sizes = [1, 256], strides = [1, 1]} : vector<8x256xf32> to vector<1x256xf32>
    %71 = vector.extract_strided_slice %67 {offsets = [3, 0], sizes = [1, 256], strides = [1, 1]} : vector<8x256xf32> to vector<1x256xf32>
    %72 = vector.extract_strided_slice %3 {offsets = [0, 0], sizes = [4, 256], strides = [1, 1]} : vector<8x256xf32> to vector<4x256xf32>
    %73 = vector.extract_strided_slice %3 {offsets = [4, 0], sizes = [4, 256], strides = [1, 1]} : vector<8x256xf32> to vector<4x256xf32>
    %74 = vector.extract_strided_slice %7 {offsets = [0, 0], sizes = [4, 256], strides = [1, 1]} : vector<8x256xf32> to vector<4x256xf32>
    %75 = vector.extract_strided_slice %7 {offsets = [4, 0], sizes = [4, 256], strides = [1, 1]} : vector<8x256xf32> to vector<4x256xf32>
    %76 = vector.broadcast %68 : vector<1x256xf32> to vector<4x256xf32>
    %77 = arith.mulf %72, %76 : vector<4x256xf32>
    %78 = vector.broadcast %69 : vector<1x256xf32> to vector<4x256xf32>
    %79 = arith.mulf %73, %78 : vector<4x256xf32>
    %80 = arith.addf %77, %79 : vector<4x256xf32>
    %cst_24 = arith.constant 5.000000e-01 : f32
    %81 = vector.broadcast %cst_24 : f32 to vector<4x256xf32>
    %82 = arith.mulf %81, %80 : vector<4x256xf32>
    %83 = vector.broadcast %70 : vector<1x256xf32> to vector<4x256xf32>
    %84 = arith.mulf %74, %83 : vector<4x256xf32>
    %85 = vector.broadcast %71 : vector<1x256xf32> to vector<4x256xf32>
    %86 = arith.mulf %75, %85 : vector<4x256xf32>
    %87 = arith.addf %84, %86 : vector<4x256xf32>
    %cst_25 = arith.constant 5.000000e-01 : f32
    %88 = vector.broadcast %cst_25 : f32 to vector<4x256xf32>
    %89 = arith.mulf %88, %87 : vector<4x256xf32>
    %90 = arith.subf %82, %89 : vector<4x256xf32>
    %c0_26 = arith.constant 0 : index
    %c0_27 = arith.constant 0 : index
    %c0_28 = arith.constant 0 : index
    %91 = vector.load %arg3[%c0_26, %c0_27, %c0_28] : memref<1x4x256xf32, #tpu.memory_space<vmem>>, vector<1x4x256xf32>
    %92 = vector.shape_cast %91 : vector<1x4x256xf32> to vector<4x256xf32>
    %93 = vector.shape_cast %90 : vector<4x256xf32> to vector<1x4x256xf32>
    tpu.vector_store %arg3[%c0_26, %c0_27, %c0_28], %93 {strides = array<i32>} : memref<1x4x256xf32, #tpu.memory_space<vmem>>, vector<1x4x256xf32>,
    return
  }
  func.func @transform_0(%arg0: i32) -> (i32, i32, i32) {
    %c0_i32 = arith.constant 0 : i32
    %c0_i32_0 = arith.constant 0 : i32
    %c0_i32_1 = arith.constant 0 : i32
    return %arg0, %c0_i32, %c0_i32_0 : i32, i32, i32
  }
  func.func @transform_1(%arg0: i32) -> (i32, i32) {
    %c0_i32 = arith.constant 0 : i32
    %c0_i32_0 = arith.constant 0 : i32
    %c0_i32_1 = arith.constant 0 : i32
    return %c0_i32, %c0_i32_0 : i32, i32
  }
  func.func @transform_2(%arg0: i32) -> (i32, i32, i32) {
    %c0_i32 = arith.constant 0 : i32
    %c0_i32_0 = arith.constant 0 : i32
    %c0_i32_1 = arith.constant 0 : i32
    return %arg0, %c0_i32, %c0_i32_0 : i32, i32, i32
  }
}

</mosaic_0001>

<llo_original>
// kernel: tpu_custom_call.1
$region0: #{tpu_custom_call.1}
  #allocation0 [shape = 'u32[]', space=smem, size = 0x4, offset = 0x4, fixed_abs, tag = 'smem constant byte address 0x4 - core index']
  #allocation1 [shape = 'u32[144,128]{1,0:T(1,128)}', space=vmem, size = 0x12000, scoped, tag = 'internal scratch']
  %s0 = inlined_call_operand.hbm [shape: f32[2,8,256], index: 0, kind: input, shape index: {}]
  %s1 = inlined_call_operand.hbm [shape: bf16[24,48], index: 1, kind: input, shape index: {}]
  %s2 = inlined_call_operand.hbm [shape: f32[2,4,256], index: 2, kind: output, shape index: {}]
  %s3 = sld [smem:[#allocation0]]
  $region49: #{tpu_custom_call.1} parent=0
    _
  %s5 = ssub.s32 1, %s3
  %s6 = scalar_select 0, %s5, %s3
  $region1: #{tpu_custom_call.1} parent=0
    #allocation2 [shape = 'u8[16384]{0}', space=vmem, size = 0x4000, scoped, tag = 'input window, operand 0']
    #allocation3 [shape = 's32[2]{0}', space=sflag, size = 0x8, scoped, tag = 'scoped memory for tpu_custom_call.1']
    #allocation4 [shape = 's32[2]{0}', space=sflag, size = 0x8, scoped, tag = 'scoped memory for tpu_custom_call.1']
    #allocation5 [shape = 'u8[6144]{0}', space=vmem, size = 0x1800, scoped, tag = 'input window, operand 1, single buffered']
    #allocation6 [shape = 's32[1]{0}', space=sflag, size = 0x4, scoped, tag = 'scoped memory for tpu_custom_call.1']
    #allocation7 [shape = 'u8[8192]{0}', space=vmem, size = 0x2000, scoped, tag = 'output window, operand 0']
    %7 = vsyncpa [#allocation3], 0
    %s8 = scalar_lea.sflag [#allocation3], 1
    %9 = vsyncpa %s8, 0
    %10 = vsyncpa [#allocation6], 0
    %11 = vsyncpa [#allocation4], 0
    %s12 = scalar_lea.sflag [#allocation4], 1
    %13 = vsyncpa %s12, 0
    loop: start=0, step=1, limit=4
    $region2: #{tpu_custom_call.1} parent=1 // loop_pre_header
      _
    $region3: #{tpu_custom_call.1} parent=1 // loop_header
      %s15 = sphi 0, %s19
      %p16 = scmp.ge.s32.totalorder %s15, 4
      %s25 = sphi 0, %s27
      %s28 = sphi 0, %s25
      %s29 = sphi 0, %s28
      %s45 = sphi 0, %s29
      %s49 = sphi 0, %s49
      %s51 = sphi 0, %s49
      %s52 = sphi 0, %s51
      %s66 = sphi 0, %s52
      %s72 = sphi 0, %s74
      %s75 = sphi 0, %s72
      %s76 = sphi 0, %s75
      %s92 = sphi 0, %s76
    $region4: #{tpu_custom_call.1} parent=1 // loop_header_branch
      %18 = sbr.rel (%p16) target = $region8
    $region5: #{tpu_custom_call.1} parent=1 // loop_body
      %s20 = ssub.s32 %s15, 1
      %s21 = ssub.s32 %s15, 2
      %s22 = sadd.s32 %s15, 1
      %s23 = ssub.s32 %s15, %s22
      %p24 = scmp.eq.s32.totalorder %s23, 0
      %s26 = sadd.s32 %s25, 1
      %s27 = scalar_select %p24, %s25, %s26
      %p30 = pneg %p24
      %p31 = scmp.eq.s32.totalorder %s15, 1
      %p32 = por %p30, %p31
      %p33 = scmp.ne.s32.totalorder %s25, %s28
      %p34 = scmp.eq.s32.totalorder %s15, 0
      %p35 = por %p33, %p34
      %p36 = scmp.ne.s32.totalorder %s25, %s28
      %p37 = scmp.eq.s32.totalorder %s20, 1
      %p38 = por %p36, %p37
      %p39 = scmp.ne.s32.totalorder %s28, %s29
      %p40 = scmp.eq.s32.totalorder %s20, 0
      %p41 = por %p39, %p40
      %p42 = scmp.ne.s32.totalorder %s28, %s29
      %p43 = scmp.eq.s32.totalorder %s21, 1
      %p44 = por %p42, %p43
      %p46 = scmp.ne.s32.totalorder %s29, %s45
      %p47 = scmp.eq.s32.totalorder %s21, 0
      %p48 = por %p46, %p47
      %s50 = sadd.s32 %s49, 1
      %p53 = scmp.eq.s32.totalorder %s15, 1
      %p54 = scmp.ne.s32.totalorder %s49, %s51
      %p55 = scmp.eq.s32.totalorder %s15, 0
      %p56 = por %p54, %p55
      %p57 = scmp.ne.s32.totalorder %s49, %s51
      %p58 = scmp.eq.s32.totalorder %s20, 1
      %p59 = por %p57, %p58
      %p60 = scmp.ne.s32.totalorder %s51, %s52
      %p61 = scmp.eq.s32.totalorder %s20, 0
      %p62 = por %p60, %p61
      %p63 = scmp.ne.s32.totalorder %s51, %s52
      %p64 = scmp.eq.s32.totalorder %s21, 1
      %p65 = por %p63, %p64
      %p67 = scmp.ne.s32.totalorder %s52, %s66
      %p68 = scmp.eq.s32.totalorder %s21, 0
      %p69 = por %p67, %p68
      %s70 = ssub.s32 %s15, %s22
      %p71 = scmp.eq.s32.totalorder %s70, 0
      %s73 = sadd.s32 %s72, 1
      %s74 = scalar_select %p71, %s72, %s73
      %p77 = pneg %p71
      %p78 = scmp.eq.s32.totalorder %s15, 1
      %p79 = por %p77, %p78
      %p80 = scmp.ne.s32.totalorder %s72, %s75
      %p81 = scmp.eq.s32.totalorder %s15, 0
      %p82 = por %p80, %p81
      %p83 = scmp.ne.s32.totalorder %s72, %s75
      %p84 = scmp.eq.s32.totalorder %s20, 1
      %p85 = por %p83, %p84
      %p86 = scmp.ne.s32.totalorder %s75, %s76
      %p87 = scmp.eq.s32.totalorder %s20, 0
      %p88 = por %p86, %p87
      %p89 = scmp.ne.s32.totalorder %s75, %s76
      %p90 = scmp.eq.s32.totalorder %s21, 1
      %p91 = por %p89, %p90
      %p93 = scmp.ne.s32.totalorder %s76, %s92
      %p94 = scmp.eq.s32.totalorder %s21, 0
      %p95 = por %p93, %p94
      %p96 = scmp.le.s32.totalorder 1, %s15
      %p97 = scmp.lt.s32.totalorder %s15, 3
      %p98 = pnand %p96, %p97
      %p99 = pneg %p98
      // Predicated region
      $region9: #{tpu_custom_call.1} parent=5 // pred_check
        _
      $region10: #{tpu_custom_call.1} parent=5 // pred_check_branch
        %101 = sbr.rel (%p98) target = $region12
      $region11: #{tpu_custom_call.1} parent=5 // pred_region
        %s102 = ssub.s32 %s15, 1
        // Predicated region
        $region13: #{tpu_custom_call.1} parent=11 // pred_check
          %p103 = pneg %p62
        $region14: #{tpu_custom_call.1} parent=11 // pred_check_branch
          %105 = sbr.rel (%p103) target = $region16
        $region15: #{tpu_custom_call.1} parent=11 // pred_region
          %s107 = ssub.s32 192, 192
          %108 = vsyncadd [#allocation6], %s107
          %s109 = sshll.u32 [#allocation5], 4
          %s110 = int_to_ptr.vmem [resolvable:$true] %s109
          %115 = dma.hbm_to_vmem [thread:$0]  %s1, 192, %s110, [#allocation6], 64, 64, 4
        $region16: #{tpu_custom_call.1} parent=11 // pred_fallthru
          _
      $region12: #{tpu_custom_call.1} parent=5 // pred_fallthru
        _
      %p116 = scmp.lt.s32.totalorder %s15, 2
      // Predicated region
      $region17: #{tpu_custom_call.1} parent=5 // pred_check
        %p117 = pneg %p116
      $region18: #{tpu_custom_call.1} parent=5 // pred_check_branch
        %119 = sbr.rel (%p117) target = $region20
      $region19: #{tpu_custom_call.1} parent=5 // pred_region
        // Predicated region
        $region21: #{tpu_custom_call.1} parent=19 // pred_check
          %p120 = pneg %p35
        $region22: #{tpu_custom_call.1} parent=19 // pred_check_branch
          %122 = sbr.rel (%p120) target = $region24
        $region23: #{tpu_custom_call.1} parent=19 // pred_region
          %s123 = sand.u32 %s25, 1
          %s124 = scalar_lea.sflag [#allocation3], %s123
          %s125 = sand.u32 %s25, 1
          %s126 = smul.addr %s125, 16
          %s127 = scalar_lea.vmem [#allocation2], %s126
          %s129 = ssub.s32 256, 256
          %130 = vsyncadd %s124, %s129
          %s131 = smul.addr %s15, 2
          %s132 = smul.addr %s131, 128
          %s133 = scalar_lea.hbm %s0, %s132
          %s135 = sshll.u32 %s127, 4
          %s136 = int_to_ptr.vmem [resolvable:$true] %s135
          %138 = dma.hbm_to_vmem [thread:$0]  %s133, 256, %s136, %s124
        $region24: #{tpu_custom_call.1} parent=19 // pred_fallthru
          _
      $region20: #{tpu_custom_call.1} parent=5 // pred_fallthru
        _
      %p139 = scmp.le.s32.totalorder 1, %s15
      %p140 = scmp.lt.s32.totalorder %s15, 3
      %p141 = pnand %p139, %p140
      %p142 = pneg %p141
      // Predicated region
      $region25: #{tpu_custom_call.1} parent=5 // pred_check
        _
      $region26: #{tpu_custom_call.1} parent=5 // pred_check_branch
        %144 = sbr.rel (%p141) target = $region28
      $region27: #{tpu_custom_call.1} parent=5 // pred_region
        %s145 = ssub.s32 %s15, 1
        %s146 = sand.u32 %s28, 1
        %s147 = scalar_lea.sflag [#allocation3], %s146
        %s148 = sand.u32 %s28, 1
        %s149 = smul.addr %s148, 16
        %s150 = scalar_lea.vmem [#allocation2], %s149
        // Predicated region
        $region29: #{tpu_custom_call.1} parent=27 // pred_check
          %p151 = pneg %p41
        $region30: #{tpu_custom_call.1} parent=27 // pred_check_branch
          %153 = sbr.rel (%p151) target = $region32
        $region31: #{tpu_custom_call.1} parent=27 // pred_region
          %154 = dma.done %s147, 256
        $region32: #{tpu_custom_call.1} parent=27 // pred_fallthru
          _
        // Predicated region
        $region33: #{tpu_custom_call.1} parent=27 // pred_check
          %p155 = pneg %p62
        $region34: #{tpu_custom_call.1} parent=27 // pred_check_branch
          %157 = sbr.rel (%p155) target = $region36
        $region35: #{tpu_custom_call.1} parent=27 // pred_region
          %158 = dma.done [#allocation6], 192
        $region36: #{tpu_custom_call.1} parent=27 // pred_fallthru
          _
        %s159 = sand.u32 %s28, 1
        %s160 = scalar_lea.sflag [#allocation3], %s159
        %s161 = sand.u32 %s28, 1
        %s162 = smul.addr %s161, 16
        %s163 = scalar_lea.vmem [#allocation2], %s162
        %p164 = pneg %p41
        %p165 = pneg %p38
        %p166 = pneg %p62
        %p167 = pneg %p59
        %p168 = pneg %p88
        %p169 = pneg %p85
        %s170 = sand.u32 %s75, 1
        %s171 = scalar_lea.sflag [#allocation4], %s170
        %s172 = sand.u32 %s75, 1
        %s173 = smul.addr %s172, 8
        %s174 = scalar_lea.vmem [#allocation7], %s173
        %v176 = vld [vmem:[%s150] sm:$0xff]
        %v177 = vld [vmem:[%s150 + $0x8] sm:$0xff]
        %v178 = vmax.f32 %v176, 0.0
        %v179 = vmax.f32 %v177, 0.0
        %v180 = vsub.f32 0.0, %v176
        %v181 = vsub.f32 0.0, %v177
        %v182 = vmax.f32 %v180, 0.0
        %v183 = vmax.f32 %v181, 0.0
        %v184 = vlaneseq
        %v185 = vand.u32 %v184, 127
        %v186 = vadd.s32 %v185, 128
        %vm187 = vcmp.ge.s32.totalorder %v185, 16
        %vm188 = vcmp.ge.s32.totalorder %v186, 16
        %v189 = vsel %vm187, 1.0, 0.0
        %v190 = vsel %vm188, 1.0, 0.0
        %vm191 = vcmp.lt.s32.totalorder %v185, 240
        %vm192 = vcmp.lt.s32.totalorder %v186, 240
        %v193 = vsel %vm191, 1.0, 0.0
        %v194 = vsel %vm192, 1.0, 0.0
        %v195 = vcvt.s32.f32 %v185
        %v196 = vcvt.s32.f32 %v186
        %v197 = vmul.f32 %v195, 0.0625
        %v198 = vmul.f32 %v196, 0.0625
        %v199 = vadd.f32 %v197, 0.03125
        %v200 = vadd.f32 %v198, 0.03125
        %v201 = vfloor.f32 %v199
        %v202 = vfloor.f32 %v200
        %v203 = vmul.f32 %v201, 16.0
        %v204 = vmul.f32 %v202, 16.0
        %v205 = vsub.f32 %v195, %v203
        %v206 = vsub.f32 %v196, %v204
        %vm207 = vcmp.ge.f32.partialorder %v205, 0.5
        %vm208 = vcmp.ge.f32.partialorder %v206, 0.5
        %v209 = vsel %vm207, 1.0, 0.0
        %v210 = vsel %vm208, 1.0, 0.0
        %vm211 = vcmp.le.f32.partialorder %v205, 14.5
        %vm212 = vcmp.le.f32.partialorder %v206, 14.5
        %v213 = vsel %vm211, 1.0, 0.0
        %v214 = vsel %vm212, 1.0, 0.0
        %215 = vrot.lane.b32.xlu0 %v178, 1
        %v216 = vpop.permute.xlu0 %215
        %217 = vrot.lane.b32.xlu0 %v182, 1
        %v218 = vpop.permute.xlu0 %217
        %219 = vrot.lane.b32.xlu0 %v179, 1
        %v220 = vpop.permute.xlu0 %219
        %221 = vrot.lane.b32.xlu0 %v183, 1
        %v222 = vpop.permute.xlu0 %221
        %vm223 = vcmp.lt.s32.totalorder %v185, 1
        %v224 = vsel %vm223, %v216, %v220
        %v225 = vsel %vm223, %v218, %v222
        %v226 = vsel %vm223, %v220, %v216
        %v227 = vsel %vm223, %v222, %v218
        %v228 = vmul.f32 %v226, %v209
        %v229 = vmul.f32 %v224, %v210
        %v230 = vmul.f32 %v227, %v209
        %v231 = vmul.f32 %v225, %v210
        %v232 = vpack.c.bf16 %v230, %v228
        %v233 = vpack.c.bf16 %v231, %v229
        %v234 = vpack.c.bf16 %v182, %v178
        %v235 = vpack.c.bf16 %v183, %v179
        %236 = vrot.lane.b32.xlu0 %v178, 127
        %v237 = vpop.permute.xlu0 %236
        %238 = vrot.lane.b32.xlu0 %v182, 127
        %v239 = vpop.permute.xlu0 %238
        %240 = vrot.lane.b32.xlu0 %v179, 127
        %v241 = vpop.permute.xlu0 %240
        %242 = vrot.lane.b32.xlu0 %v183, 127
        %v243 = vpop.permute.xlu0 %242
        %vm244 = vcmp.lt.s32.totalorder %v185, 127
        %v245 = vsel %vm244, %v237, %v241
        %v246 = vsel %vm244, %v239, %v243
        %v247 = vsel %vm244, %v241, %v237
        %v248 = vsel %vm244, %v243, %v239
        %v249 = vmul.f32 %v245, %v213
        %v250 = vmul.f32 %v247, %v214
        %v251 = vmul.f32 %v246, %v213
        %v252 = vmul.f32 %v248, %v214
        %v253 = vpack.c.bf16 %v251, %v249
        %v254 = vpack.c.bf16 %v252, %v250
        %v255 = vld [vmem:[#allocation5] sm:$0xf]
        %v256 = vld [vmem:[#allocation5 + $0x4] sm:$0xf]
        %v257 = vld [vmem:[#allocation5 + $0x8] sm:$0xf]
        %v261 = vunpack.c.l.b16 %v255
        %v262 = vunpack.c.l.b16 %v256
        %v263 = vunpack.c.l.b16 %v257
        %v264 = vpack.c.b16 %v262, %v261
        %v265 = vpack.c.b16 %v263, %v263
        %vm266 = vcmask 392192
        %v268 = vsel %vm266, %v264, 0
        %v271 = vsel %vm266, %v265, 0
        %273 = vmatprep.subr.bf16.mxu0 %v233
        %274 = vmatpush1.bf16.msra.mxu0 %v232
        %275 = vmatprep.subr.bf16.mxu0 %v235
        %276 = vmatpush1.bf16.msra.mxu0 %v234
        %277 = vmatprep.subr.bf16.mxu0 %v254
        %278 = vmatpush1.bf16.msra.mxu0 %v253
        %279 = vmatprep.subr.bf16.mxu0 0
        %280 = vmatpush1.bf16.msra.mxu0 0
        %281 = vmatprep.subr.bf16.mxu0 0
        %282 = vmatpush1.bf16.msra.mxu0 0
        %283 = vmatprep.subr.bf16.mxu0 0
        %284 = vmatpush1.bf16.msra.mxu0 0
        %285 = vmatprep.subr.bf16.mxu0 0
        %286 = vmatpush1.bf16.msra.mxu0 0
        %287 = vmatprep.subr.bf16.mxu0 0
        %288 = vmatpush1.bf16.msra.mxu0 0
        %289 = vmatprep.subr.bf16.mxu0 0
        %290 = vmatpush1.bf16.msra.mxu0 0
        %291 = vmatprep.subr.bf16.mxu0 0
        %292 = vmatpush1.bf16.msra.mxu0 0
        %293 = vmatprep.subr.bf16.mxu0 0
        %294 = vmatpush1.bf16.msra.mxu0 0
        %295 = vmatprep.subr.bf16.mxu0 0
        %296 = vmatpush1.bf16.msra.mxu0 0
        %297 = vmatprep.subr.bf16.mxu0 0
        %298 = vmatpush1.bf16.msra.mxu0 0
        %299 = vmatprep.subr.bf16.mxu0 0
        %300 = vmatpush1.bf16.msra.mxu0 0
        %301 = vmatprep.subr.bf16.mxu0 0
        %302 = vmatpush1.bf16.msra.mxu0 0
        %303 = vmatprep.subr.bf16.mxu0 0
        %304 = vmatpush1.bf16.msra.mxu0 0
        %305 = vmatprep.mubr.bf16.mxu0 0
        %306 = vmatmul.mubr.bf16.gmra.mrb[0].mxu0 %v268
        %v307 = vpop.f32.mrb[0].mxu0
        %v308 = vadd.f32 0.0, %v307
        %v309 = vpop.f32.mrb[0].mxu0
        %v310 = vadd.f32 0.0, %v309
        %v311 = vpop.f32.mrb[0].mxu0
        %v312 = vadd.f32 0.0, %v311
        %v313 = vpop.f32.mrb[0].mxu0
        %v314 = vadd.f32 0.0, %v313
        %315 = vmatprep.mubr.bf16.mxu0 0
        %316 = vmatmul.mubr.bf16.gmra.mrb[0].mxu0 %v271
        %v317 = vpop.f32.mrb[0].mxu0
        %v318 = vadd.f32 0.0, %v317
        %v319 = vpop.f32.mrb[0].mxu0
        %v320 = vadd.f32 0.0, %v319
        %v321 = vpop.f32.mrb[0].mxu0
        %v322 = vpop.f32.mrb[0].mxu0
        %323 = vdwg.mxu0
        %324 = vrot.lane.b32.xlu0 %v308, 16
        %v325 = vpop.permute.xlu0 %324
        %326 = vrot.lane.b32.xlu0 %v310, 16
        %v327 = vpop.permute.xlu0 %326
        %vm328 = vcmp.lt.s32.totalorder %v185, 16
        %v329 = vsel %vm328, %v325, %v327
        %v330 = vsel %vm328, %v327, %v325
        %v331 = vmul.f32 %v330, %v189
        %v332 = vmul.f32 %v329, %v190
        %v333 = vadd.f32 %v312, %v331
        %v334 = vadd.f32 %v314, %v332
        %335 = vrot.lane.b32.xlu0 %v318, 112
        %v336 = vpop.permute.xlu0 %335
        %337 = vrot.lane.b32.xlu0 %v320, 112
        %v338 = vpop.permute.xlu0 %337
        %vm339 = vcmp.lt.s32.totalorder %v185, 112
        %v340 = vsel %vm339, %v336, %v338
        %v341 = vsel %vm339, %v338, %v336
        %v342 = vmul.f32 %v340, %v193
        %v343 = vmul.f32 %v341, %v194
        %v344 = vadd.f32 %v333, %v342
        %v345 = vadd.f32 %v334, %v343
        %v346 = vsub.f32 0.0, %v344
        %v347 = vsub.f32 0.0, %v345
        %v348 = vmul.f32 %v346, 1.442695
        %v349 = vpow.pop %v348
        %v350 = vmul.f32 %v347, 1.442695
        %v351 = vpow.pop %v350
        %v352 = vadd.f32 %v349, 1.0
        %v353 = vadd.f32 %v351, 1.0
        %v354 = vrcp.pop %v352
        %v355 = vrcp.pop %v353
        %v356 = vlaneseq
        %v357 = vshrl.u32 %v356, 7
        %v358 = vsub.s32 0, %v357
        %v359 = vrot.slane %v354, %v358
        %v360 = vlaneseq
        %v361 = vshrl.u32 %v360, 7
        %v362 = vsub.s32 0, %v361
        %v363 = vrot.slane %v355, %v362
        %v364 = vmul.f32 %v178, %v359
        %v365 = vmul.f32 %v179, %v363
        %v366 = vlaneseq
        %v367 = vshrl.u32 %v366, 7
        %v368 = vsub.s32 1, %v367
        %v369 = vrot.slane %v354, %v368
        %v370 = vlaneseq
        %v371 = vshrl.u32 %v370, 7
        %v372 = vsub.s32 1, %v371
        %v373 = vrot.slane %v355, %v372
        %v374 = vmul.f32 %v178, %v369
        %v375 = vmul.f32 %v179, %v373
        %v378 = vrot.slane %v374, 4
        %v379 = vrot.slane %v375, 4
        %v382 = vadd.f32 %v364, %v378
        %v383 = vadd.f32 %v365, %v379
        %v384 = vmul.f32 %v382, 0.5
        %v385 = vmul.f32 %v383, 0.5
        %v386 = vlaneseq
        %v387 = vshrl.u32 %v386, 7
        %v388 = vsub.s32 2, %v387
        %v389 = vrot.slane %v354, %v388
        %v390 = vlaneseq
        %v391 = vshrl.u32 %v390, 7
        %v392 = vsub.s32 2, %v391
        %v393 = vrot.slane %v355, %v392
        %v394 = vmul.f32 %v182, %v389
        %v395 = vmul.f32 %v183, %v393
        %v396 = vlaneseq
        %v397 = vshrl.u32 %v396, 7
        %v398 = vsub.s32 3, %v397
        %v399 = vrot.slane %v354, %v398
        %v400 = vlaneseq
        %v401 = vshrl.u32 %v400, 7
        %v402 = vsub.s32 3, %v401
        %v403 = vrot.slane %v355, %v402
        %v404 = vmul.f32 %v182, %v399
        %v405 = vmul.f32 %v183, %v403
        %v408 = vrot.slane %v404, 4
        %v409 = vrot.slane %v405, 4
        %v412 = vadd.f32 %v394, %v408
        %v413 = vadd.f32 %v395, %v409
        %v414 = vmul.f32 %v412, 0.5
        %v415 = vmul.f32 %v413, 0.5
        %v416 = vsub.f32 %v384, %v414
        %v417 = vsub.f32 %v385, %v415
        %v420 = vcombine.low %v416, %v417
        %422 = vst [vmem:[%s174] sm:$0xff] %v420
        %s423 = sand.u32 %s75, 1
        %s424 = scalar_lea.sflag [#allocation4], %s423
        %s425 = sand.u32 %s75, 1
        %s426 = smul.addr %s425, 8
        %s427 = scalar_lea.vmem [#allocation7], %s426
        // Predicated region
        $region37: #{tpu_custom_call.1} parent=27 // pred_check
          %p428 = pneg %p85
        $region38: #{tpu_custom_call.1} parent=27 // pred_check_branch
          %430 = sbr.rel (%p428) target = $region40
        $region39: #{tpu_custom_call.1} parent=27 // pred_region
          %s432 = ssub.s32 128, 128
          %433 = vsyncadd %s424, %s432
          %s434 = smul.addr %s20, 2
          %s435 = smul.addr %s434, 64
          %s436 = scalar_lea.hbm %s2, %s435
          %s438 = sshll.u32 %s427, 4
          %s439 = int_to_ptr.vmem [resolvable:$true] %s438
          %441 = dma.vmem_to_hbm [thread:$0]  %s439, 128, %s436, %s424
        $region40: #{tpu_custom_call.1} parent=27 // pred_fallthru
          _
      $region28: #{tpu_custom_call.1} parent=5 // pred_fallthru
        _
      %p442 = scmp.le.s32.totalorder 2, %s15
      // Predicated region
      $region41: #{tpu_custom_call.1} parent=5 // pred_check
        %p443 = pneg %p442
      $region42: #{tpu_custom_call.1} parent=5 // pred_check_branch
        %445 = sbr.rel (%p443) target = $region44
      $region43: #{tpu_custom_call.1} parent=5 // pred_region
        %s446 = ssub.s32 %s15, 2
        // Predicated region
        $region45: #{tpu_custom_call.1} parent=43 // pred_check
          %p447 = pneg %p91
        $region46: #{tpu_custom_call.1} parent=43 // pred_check_branch
          %449 = sbr.rel (%p447) target = $region48
        $region47: #{tpu_custom_call.1} parent=43 // pred_region
          %s450 = sand.u32 %s76, 1
          %s451 = scalar_lea.sflag [#allocation4], %s450
          %s452 = sand.u32 %s76, 1
          %s453 = smul.addr %s452, 8
          %s454 = scalar_lea.vmem [#allocation7], %s453
          %455 = dma.done %s451, 128
        $region48: #{tpu_custom_call.1} parent=43 // pred_fallthru
          _
      $region44: #{tpu_custom_call.1} parent=5 // pred_fallthru
        _
    $region6: #{tpu_custom_call.1} parent=1 // loop_footer
      %s19 = sadd.s32 1, %s15
    $region7: #{tpu_custom_call.1} parent=1 // loop_footer_branch
      %14 = sbr.rel target = $region3
    $region8: #{tpu_custom_call.1} parent=1 // loop_exit
      _
    %456 = vsyncpa [#allocation3], 1
    %s457 = scalar_lea.sflag [#allocation3], 1
    %458 = vsyncpa %s457, 1
    %459 = vsyncpa [#allocation6], 1
    %460 = vsyncpa [#allocation4], 1
    %s461 = scalar_lea.sflag [#allocation4], 1
    %462 = vsyncpa %s461, 1

</llo_original>
